<compile_context>
chip_gen: v7x
topology: tpu7x:2x2x1
jax: 0.10.0
libtpu: 0.0.40
codegen_flags: <defaults>
</compile_context>

<pallas_src>
import jax
import jax.numpy as jnp
from jax.experimental import pallas as pl
from jax.experimental.pallas import tpu as pltpu

HIDDEN = 384          # fixed by the module definition
NEG_SLOPE = 0.01      # nn.LeakyReLU default


def _leaky_relu(x):
    return jnp.where(x > 0, x, NEG_SLOPE * x)


def _round_up(n, m):
    return ((n + m - 1) // m) * m


def _ae_partial_kernel(x_ref, w1_ref, w2_ref, w3_ref, w4_ref, out_ref):
    """One grid step = one batch tile.

    Writes a (1, D) row of per-lane squared-error partial sums (reduced over
    the tile's rows only); the cross-lane reduction and the mean happen
    outside the kernel.  No cross-step state -> batch axis is 'parallel'.
    """
    xb = x_ref[...]                       # (bt, D) bf16 (streamed)
    xf = xb.astype(jnp.float32)           # MSE target (bf16-rounded input)

    # encoder: Linear(D, 384) -> LeakyReLU -> Linear(384, E)
    h = jnp.dot(xb, w1_ref[...], preferred_element_type=jnp.float32)
    h = _leaky_relu(h).astype(jnp.bfloat16)
    z = jnp.dot(h, w2_ref[...], preferred_element_type=jnp.float32)

    # decoder: Linear(E, 384) -> LeakyReLU -> Linear(384, D)
    d = jnp.dot(z.astype(jnp.bfloat16), w3_ref[...],
                preferred_element_type=jnp.float32)
    d = _leaky_relu(d).astype(jnp.bfloat16)
    recon = jnp.dot(d, w4_ref[...], preferred_element_type=jnp.float32)

    diff = recon - xf
    # Row-axis (sublane) partial reduction only -> lane-dense (1, D) output.
    out_ref[0] = jnp.sum(diff * diff, axis=0, keepdims=True)


def _choose_batch_tile(B, batch_tile):
    # bf16 packs 2 rows per sublane -> keep tiles a multiple of 16.
    batch_tile = max(16, _round_up(int(batch_tile), 16))
    if B >= 32:
        # Guarantee >= 2 grid steps for moderate batches so both v7x
        # TensorCores get work under dimension_semantics=("parallel",).
        target = _round_up(-(-B // 2), 16)   # ceil(B/2) rounded up to 16
    else:
        target = _round_up(B, 16)
    return min(batch_tile, target)


def _vmem_limit_bytes(bt, D, E):
    x_bytes = 2 * bt * D * 2                              # double-buffered bf16 x tile
    w_bytes = 2 * (2 * HIDDEN * (D + E))                  # single-buffered bf16 weights
    out_bytes = 2 * D * 4                                 # tiny per-tile output
    interm = 4 * bt * max(HIDDEN, D) * 4                  # f32 intermediates headroom
    need = x_bytes + w_bytes + out_bytes + interm
    # 2x headroom for compiler scratch; never request the full 64 MiB of a v7x TC.
    return int(min(max(2 * need, 16 << 20), 32 << 20))


def autoencoder_loss(x, w1_t, w2_t, w3_t, w4_t, *, batch_tile=1024):
    """x: (B, input_size); w*_t are (in, out) transposed PyTorch Linear weights."""
    B, D = x.shape
    E = w2_t.shape[1]
    assert w1_t.shape == (D, HIDDEN)
    assert w2_t.shape == (HIDDEN, E)
    assert w3_t.shape == (E, HIDDEN)
    assert w4_t.shape == (HIDDEN, D)

    bt = _choose_batch_tile(B, batch_tile)
    b_pad = _round_up(B, bt)
    num_tiles = b_pad // bt

    # NOTE: zero row padding is only valid because every Linear is bias-free
    # and LeakyReLU(0) == 0, so a zero input row reconstructs to exactly zero
    # (zero squared error).  If biases are ever added, mask padded rows.
    xb = x.astype(jnp.bfloat16)
    if b_pad != B:
        xb = jnp.pad(xb, ((0, b_pad - B), (0, 0)))

    w1_b = w1_t.astype(jnp.bfloat16)
    w2_b = w2_t.astype(jnp.bfloat16)
    w3_b = w3_t.astype(jnp.bfloat16)
    w4_b = w4_t.astype(jnp.bfloat16)

    # TODO(synk): tile w1/w4 over the D axis (extra grid axis + f32 accumulator)
    # when input_size is very large (>~4K) so weight blocks fit v7x's 64 MiB VMEM.
    def _resident_weight_spec(shape):
        # Constant index_map -> never re-fetched; single buffer (no dead copy).
        return pl.BlockSpec(shape, lambda i: (0, 0), pipeline_mode=pl.Buffered(1))

    flops = 4 * b_pad * HIDDEN * (D + E)                      # 2 flops/MAC, 4 matmuls
    bytes_accessed = b_pad * D * 2 + 4 * HIDDEN * (D + E) + num_tiles * D * 4

    partials = pl.pallas_call(
        _ae_partial_kernel,
        out_shape=jax.ShapeDtypeStruct((num_tiles, 1, D), jnp.float32),
        grid_spec=pltpu.PrefetchScalarGridSpec(
            num_scalar_prefetch=0,
            grid=(num_tiles,),
            in_specs=[
                pl.BlockSpec((bt, D), lambda i: (i, 0)),      # x tile (streams, bf16)
                _resident_weight_spec((D, HIDDEN)),            # encoder Linear 1
                _resident_weight_spec((HIDDEN, E)),            # encoder Linear 2
                _resident_weight_spec((E, HIDDEN)),            # decoder Linear 1
                _resident_weight_spec((HIDDEN, D)),            # decoder Linear 2
            ],
            out_specs=pl.BlockSpec((1, 1, D), lambda i: (i, 0, 0)),
        ),
        compiler_params=pltpu.CompilerParams(
            # No cross-iteration dependency -> parallel (2-TC sharding on v7x).
            dimension_semantics=("parallel",),
            vmem_limit_bytes=_vmem_limit_bytes(bt, D, E),
        ),
        cost_estimate=pl.CostEstimate(
            flops=int(flops), transcendentals=0, bytes_accessed=int(bytes_accessed)),
    )(xb, w1_b, w2_b, w3_b, w4_b)

    # Final lane reduction + MSE mean over the ORIGINAL (unpadded) element count.
    return jnp.sum(partials) / (B * D)


def _jax_reference_bf16(x, w1_t, w2_t, w3_t, w4_t):
    """Same bf16-stream / bf16-matmul / f32-accumulate recipe as the kernel."""
    xb = x.astype(jnp.bfloat16)
    xf = xb.astype(jnp.float32)
    h = _leaky_relu(jnp.dot(xb, w1_t.astype(jnp.bfloat16),
                            preferred_element_type=jnp.float32))
    z = jnp.dot(h.astype(jnp.bfloat16), w2_t.astype(jnp.bfloat16),
                preferred_element_type=jnp.float32)
    d = _leaky_relu(jnp.dot(z.astype(jnp.bfloat16), w3_t.astype(jnp.bfloat16),
                            preferred_element_type=jnp.float32))
    r = jnp.dot(d.astype(jnp.bfloat16), w4_t.astype(jnp.bfloat16),
                preferred_element_type=jnp.float32)
    return jnp.mean((r - xf) ** 2)


def _jax_reference_f32(x, w1_t, w2_t, w3_t, w4_t):
    x = x.astype(jnp.float32)
    h = _leaky_relu(x @ w1_t)
    z = h @ w2_t
    d = _leaky_relu(z @ w3_t)
    r = d @ w4_t
    return jnp.mean((r - x) ** 2)


if __name__ == "__main__":
    INPUT_SIZE = 256   # input_size
    ENCODE_SIZE = 32   # encode_size

    key = jax.random.PRNGKey(0)
    kx, k1, k2, k3, k4 = jax.random.split(key, 5)

    # PyTorch Linear weights are (out, in); build deterministically and
    # transpose to (in, out) for the kernel (y = x @ W.T  <=>  y = x @ W_t).
    def init_w(k, out_f, in_f):
        bound = 1.0 / jnp.sqrt(in_f)
        return jax.random.uniform(k, (out_f, in_f), jnp.float32, -bound, bound)

    w1 = init_w(k1, HIDDEN, INPUT_SIZE)      # encoder[0]
    w2 = init_w(k2, ENCODE_SIZE, HIDDEN)     # encoder[2]
    w3 = init_w(k3, HIDDEN, ENCODE_SIZE)     # decoder[0]
    w4 = init_w(k4, INPUT_SIZE, HIDDEN)      # decoder[2]
    w1_t, w2_t, w3_t, w4_t = w1.T, w2.T, w3.T, w4.T

    # B=16: single grid step.  B=200: two grid steps + zero-row padding.
    for B in (16, 200):
        x = jax.random.normal(jax.random.fold_in(kx, B), (B, INPUT_SIZE),
                              dtype=jnp.float32)

        loss = autoencoder_loss(x, w1_t, w2_t, w3_t, w4_t)
        loss = jax.block_until_ready(loss)

        ref_bf16 = _jax_reference_bf16(x, w1_t, w2_t, w3_t, w4_t)
        ref_f32 = _jax_reference_f32(x, w1_t, w2_t, w3_t, w4_t)

        assert jnp.allclose(loss, ref_bf16, rtol=2e-3, atol=1e-5), (B, loss, ref_bf16)
        assert jnp.allclose(loss, ref_f32, rtol=3e-2, atol=1e-3), (B, loss, ref_f32)

    print("KERNEL_OK")
</pallas_src>

<mosaic_0001>
module attributes {stable_mosaic.version = 11 : i64} {
  func.func @_ae_partial_kernel(%arg0: i32, %arg1: memref<16x256xbf16, #tpu.memory_space<vmem>>, %arg2: memref<256x384xbf16, #tpu.memory_space<vmem>>, %arg3: memref<384x32xbf16, #tpu.memory_space<vmem>>, %arg4: memref<32x384xbf16, #tpu.memory_space<vmem>>, %arg5: memref<384x256xbf16, #tpu.memory_space<vmem>>, %arg6: memref<1x1x256xf32, #tpu.memory_space<vmem>>) attributes {dimension_semantics = [#tpu.dimension_semantics<parallel>], iteration_bounds = array<i64: 1>, scalar_prefetch = 0 : i64, scratch_operands = 0 : i64, tpu.core_type = #tpu.core_type<tc>, window_params = [{transform_indices = @transform_0, window_bounds = array<i64: 16, 256>}, {pipeline_mode = #tpu.pipeline_mode<synchronous>, transform_indices = @transform_1, window_bounds = array<i64: 256, 384>}, {pipeline_mode = #tpu.pipeline_mode<synchronous>, transform_indices = @transform_2, window_bounds = array<i64: 384, 32>}, {pipeline_mode = #tpu.pipeline_mode<synchronous>, transform_indices = @transform_3, window_bounds = array<i64: 32, 384>}, {pipeline_mode = #tpu.pipeline_mode<synchronous>, transform_indices = @transform_4, window_bounds = array<i64: 384, 256>}, {transform_indices = @transform_5, window_bounds = array<i64: 1, 1, 256>}]} {
    %c0 = arith.constant 0 : index
    %c0_0 = arith.constant 0 : index
    %0 = vector.load %arg1[%c0, %c0_0] : memref<16x256xbf16, #tpu.memory_space<vmem>>, vector<16x256xbf16>
    %1 = arith.extf %0 : vector<16x256xbf16> to vector<16x256xf32>
    %c0_1 = arith.constant 0 : index
    %c0_2 = arith.constant 0 : index
    %2 = vector.load %arg2[%c0_1, %c0_2] : memref<256x384xbf16, #tpu.memory_space<vmem>>, vector<256x384xbf16>
    %cst = arith.constant dense<0.000000e+00> : vector<16x384xf32>
    %3 = tpu.matmul %0, %2, %cst {dimension_numbers = #tpu.dot_dimension_numbers<[1], [0], [0], [1], [0, 0, 1, 1], [], []>} : vector<16x256xbf16>, vector<256x384xbf16>, vector<16x384xf32> -> vector<16x384xf32>
    %cst_3 = arith.constant 0.000000e+00 : f32
    %4 = vector.broadcast %cst_3 : f32 to vector<16x384xf32>
    %5 = arith.cmpf ogt, %3, %4 : vector<16x384xf32>
    %cst_4 = arith.constant 0.00999999977 : f32
    %6 = vector.broadcast %cst_4 : f32 to vector<16x384xf32>
    %7 = arith.mulf %6, %3 : vector<16x384xf32>
    %8 = arith.select %5, %3, %7 : vector<16x384xi1>, vector<16x384xf32>
    %9 = arith.truncf %8 : vector<16x384xf32> to vector<16x384xbf16>
    %c0_5 = arith.constant 0 : index
    %c0_6 = arith.constant 0 : index
    %10 = vector.load %arg3[%c0_5, %c0_6] : memref<384x32xbf16, #tpu.memory_space<vmem>>, vector<384x32xbf16>
    %cst_7 = arith.constant dense<0.000000e+00> : vector<16x32xf32>
    %11 = tpu.matmul %9, %10, %cst_7 {dimension_numbers = #tpu.dot_dimension_numbers<[1], [0], [0], [1], [0, 0, 1, 1], [], []>} : vector<16x384xbf16>, vector<384x32xbf16>, vector<16x32xf32> -> vector<16x32xf32>
    %12 = arith.truncf %11 : vector<16x32xf32> to vector<16x32xbf16>
    %c0_8 = arith.constant 0 : index
    %c0_9 = arith.constant 0 : index
    %13 = vector.load %arg4[%c0_8, %c0_9] : memref<32x384xbf16, #tpu.memory_space<vmem>>, vector<32x384xbf16>
    %cst_10 = arith.constant dense<0.000000e+00> : vector<16x384xf32>
    %14 = tpu.matmul %12, %13, %cst_10 {dimension_numbers = #tpu.dot_dimension_numbers<[1], [0], [0], [1], [0, 0, 1, 1], [], []>} : vector<16x32xbf16>, vector<32x384xbf16>, vector<16x384xf32> -> vector<16x384xf32>
    %cst_11 = arith.constant 0.000000e+00 : f32
    %15 = vector.broadcast %cst_11 : f32 to vector<16x384xf32>
    %16 = arith.cmpf ogt, %14, %15 : vector<16x384xf32>
    %cst_12 = arith.constant 0.00999999977 : f32
    %17 = vector.broadcast %cst_12 : f32 to vector<16x384xf32>
    %18 = arith.mulf %17, %14 : vector<16x384xf32>
    %19 = arith.select %16, %14, %18 : vector<16x384xi1>, vector<16x384xf32>
    %20 = arith.truncf %19 : vector<16x384xf32> to vector<16x384xbf16>
    %c0_13 = arith.constant 0 : index
    %c0_14 = arith.constant 0 : index
    %21 = vector.load %arg5[%c0_13, %c0_14] : memref<384x256xbf16, #tpu.memory_space<vmem>>, vector<384x256xbf16>
    %cst_15 = arith.constant dense<0.000000e+00> : vector<16x256xf32>
    %22 = tpu.matmul %20, %21, %cst_15 {dimension_numbers = #tpu.dot_dimension_numbers<[1], [0], [0], [1], [0, 0, 1, 1], [], []>} : vector<16x384xbf16>, vector<384x256xbf16>, vector<16x256xf32> -> vector<16x256xf32>
    %23 = arith.subf %22, %1 : vector<16x256xf32>
    %24 = arith.mulf %23, %23 : vector<16x256xf32>
    %cst_16 = arith.constant dense<0.000000e+00> : vector<256xf32>
    %25 = vector.multi_reduction <add>, %24, %cst_16 [0] : vector<16x256xf32> to vector<256xf32>
    %26 = vector.shape_cast %25 : vector<256xf32> to vector<1x256xf32>
    %c0_17 = arith.constant 0 : index
    %c0_18 = arith.constant 0 : index
    %c0_19 = arith.constant 0 : index
    %27 = vector.load %arg6[%c0_17, %c0_18, %c0_19] : memref<1x1x256xf32, #tpu.memory_space<vmem>>, vector<1x1x256xf32>
    %28 = vector.shape_cast %27 : vector<1x1x256xf32> to vector<1x256xf32>
    %29 = vector.shape_cast %26 : vector<1x256xf32> to vector<1x1x256xf32>
    tpu.vector_store %arg6[%c0_17, %c0_18, %c0_19], %29 {strides = array<i32>} : memref<1x1x256xf32, #tpu.memory_space<vmem>>, vector<1x1x256xf32>,
    return
  }
  func.func @transform_0(%arg0: i32) -> (i32, i32) {
    %c0_i32 = arith.constant 0 : i32
    %c0_i32_0 = arith.constant 0 : i32
    return %arg0, %c0_i32 : i32, i32
  }
  func.func @transform_1(%arg0: i32) -> (i32, i32) {
    %c0_i32 = arith.constant 0 : i32
    %c0_i32_0 = arith.constant 0 : i32
    %c0_i32_1 = arith.constant 0 : i32
    return %c0_i32, %c0_i32_0 : i32, i32
  }
  func.func @transform_2(%arg0: i32) -> (i32, i32) {
    %c0_i32 = arith.constant 0 : i32
    %c0_i32_0 = arith.constant 0 : i32
    %c0_i32_1 = arith.constant 0 : i32
    return %c0_i32, %c0_i32_0 : i32, i32
  }
  func.func @transform_3(%arg0: i32) -> (i32, i32) {
    %c0_i32 = arith.constant 0 : i32
    %c0_i32_0 = arith.constant 0 : i32
    %c0_i32_1 = arith.constant 0 : i32
    return %c0_i32, %c0_i32_0 : i32, i32
  }
  func.func @transform_4(%arg0: i32) -> (i32, i32) {
    %c0_i32 = arith.constant 0 : i32
    %c0_i32_0 = arith.constant 0 : i32
    %c0_i32_1 = arith.constant 0 : i32
    return %c0_i32, %c0_i32_0 : i32, i32
  }
  func.func @transform_5(%arg0: i32) -> (i32, i32, i32) {
    %c0_i32 = arith.constant 0 : i32
    %c0_i32_0 = arith.constant 0 : i32
    %c0_i32_1 = arith.constant 0 : i32
    return %arg0, %c0_i32, %c0_i32_0 : i32, i32, i32
  }
}

</mosaic_0001>

<llo_original>
// kernel: tpu_custom_call.1
$region0: #{tpu_custom_call.1}
  #allocation0 [shape = 'u32[]', space=smem, size = 0x4, offset = 0x4, fixed_abs, tag = 'smem constant byte address 0x4 - core index']
  #allocation1 [shape = 'u32[144,128]{1,0:T(1,128)}', space=vmem, size = 0x12000, scoped, tag = 'internal scratch']
  %s0 = inlined_call_operand.vmem [shape: bf16[16,256], index: 0, kind: input, shape index: {}]
  %s1 = inlined_call_operand.hbm [shape: bf16[256,384], index: 1, kind: input, shape index: {}]
  %s2 = inlined_call_operand.vmem [shape: bf16[384,32], index: 2, kind: input, shape index: {}]
  %s3 = inlined_call_operand.vmem [shape: bf16[32,384], index: 3, kind: input, shape index: {}]
  %s4 = inlined_call_operand.hbm [shape: bf16[384,256], index: 4, kind: input, shape index: {}]
  %s5 = inlined_call_operand.hbm [shape: f32[1,1,256], index: 5, kind: output, shape index: {}]
  %s6 = sld [smem:[#allocation0]]
  $region38: #{tpu_custom_call.1} parent=0
    _
  %s8 = ssub.s32 1, %s6
  %s9 = scalar_select 0, %s8, %s6
  $region1: #{tpu_custom_call.1} parent=0
    #allocation2 [shape = 'u8[196608]{0}', space=vmem, size = 0x30000, scoped, tag = 'input window, operand 1, single buffered']
    #allocation3 [shape = 's32[1]{0}', space=sflag, size = 0x4, scoped, tag = 'scoped memory for tpu_custom_call.1']
    #allocation4 [shape = 's32[1]{0}', space=sflag, size = 0x4, scoped, tag = 'scoped memory for tpu_custom_call.1']
    #allocation5 [shape = 'u8[196608]{0}', space=vmem, size = 0x30000, scoped, tag = 'input window, operand 4, single buffered']
    #allocation6 [shape = 's32[1]{0}', space=sflag, size = 0x4, scoped, tag = 'scoped memory for tpu_custom_call.1']
    #allocation7 [shape = 'u8[1024]{0}', space=vmem, size = 0x400, scoped, tag = 'output window, operand 0, single buffered']
    %10 = vsyncpa [#allocation3], 0
    %11 = vsyncpa [#allocation6], 0
    %12 = vsyncpa [#allocation4], 0
    // Predicated region
    $region2: #{tpu_custom_call.1} parent=1 // pred_check
      _
    $region3: #{tpu_custom_call.1} parent=1 // pred_check_branch
      %14 = sbr.rel (0) target = $region5
    $region4: #{tpu_custom_call.1} parent=1 // pred_region
      _
    $region5: #{tpu_custom_call.1} parent=1 // pred_fallthru
      _
    // Predicated region
    $region6: #{tpu_custom_call.1} parent=1 // pred_check
      _
    $region7: #{tpu_custom_call.1} parent=1 // pred_check_branch
      %16 = sbr.rel (0) target = $region9
    $region8: #{tpu_custom_call.1} parent=1 // pred_region
      %s18 = ssub.s32 6144, 6144
      %19 = vsyncadd [#allocation3], %s18
      %s20 = sshll.u32 [#allocation2], 4
      %s21 = int_to_ptr.vmem [resolvable:$true] %s20
      %26 = dma.hbm_to_vmem [thread:$0]  %s1, 6144, %s21, [#allocation3], 192, 192, 12
    $region9: #{tpu_custom_call.1} parent=1 // pred_fallthru
      _
    // Predicated region
    $region10: #{tpu_custom_call.1} parent=1 // pred_check
      _
    $region11: #{tpu_custom_call.1} parent=1 // pred_check_branch
      %28 = sbr.rel (0) target = $region13
    $region12: #{tpu_custom_call.1} parent=1 // pred_region
      _
    $region13: #{tpu_custom_call.1} parent=1 // pred_fallthru
      _
    // Predicated region
    $region14: #{tpu_custom_call.1} parent=1 // pred_check
      _
    $region15: #{tpu_custom_call.1} parent=1 // pred_check_branch
      %30 = sbr.rel (0) target = $region17
    $region16: #{tpu_custom_call.1} parent=1 // pred_region
      _
    $region17: #{tpu_custom_call.1} parent=1 // pred_fallthru
      _
    // Predicated region
    $region18: #{tpu_custom_call.1} parent=1 // pred_check
      _
    $region19: #{tpu_custom_call.1} parent=1 // pred_check_branch
      %32 = sbr.rel (0) target = $region21
    $region20: #{tpu_custom_call.1} parent=1 // pred_region
      %s34 = ssub.s32 6144, 6144
      %35 = vsyncadd [#allocation6], %s34
      %s36 = sshll.u32 [#allocation5], 4
      %s37 = int_to_ptr.vmem [resolvable:$true] %s36
      %42 = dma.hbm_to_vmem [thread:$0]  %s4, 6144, %s37, [#allocation6], 128, 128, 8
    $region21: #{tpu_custom_call.1} parent=1 // pred_fallthru
      _
    // Predicated region
    $region22: #{tpu_custom_call.1} parent=1 // pred_check
      _
    $region23: #{tpu_custom_call.1} parent=1 // pred_check_branch
      %44 = sbr.rel (0) target = $region25
    $region24: #{tpu_custom_call.1} parent=1 // pred_region
      %45 = dma.done [#allocation3], 6144
    $region25: #{tpu_custom_call.1} parent=1 // pred_fallthru
      _
    // Predicated region
    $region26: #{tpu_custom_call.1} parent=1 // pred_check
      _
    $region27: #{tpu_custom_call.1} parent=1 // pred_check_branch
      %47 = sbr.rel (0) target = $region29
    $region28: #{tpu_custom_call.1} parent=1 // pred_region
      %48 = dma.done [#allocation6], 6144
    $region29: #{tpu_custom_call.1} parent=1 // pred_fallthru
      _
    %v50 = vld [vmem:[%s0] sm:$0xff]
    %v51 = vld [vmem:[%s0 + $0x8] sm:$0xff]
    %v52 = vunpack.c.l.bf16 %v50
    %v53 = vunpack.c.h.bf16 %v50
    %v54 = vunpack.c.l.bf16 %v51
    %v55 = vunpack.c.h.bf16 %v51
    %v56 = vld [vmem:[#allocation2] sm:$0xff]
    %v57 = vld [vmem:[#allocation2 + $0x8] sm:$0xf]
    %v58 = vld [vmem:[#allocation2 + $0xc] sm:$0xff]
    %v59 = vld [vmem:[#allocation2 + $0x14] sm:$0xf]
    %v60 = vld [vmem:[#allocation2 + $0x18] sm:$0xff]
    %v61 = vld [vmem:[#allocation2 + $0x20] sm:$0xf]
    %v62 = vld [vmem:[#allocation2 + $0x24] sm:$0xff]
    %v63 = vld [vmem:[#allocation2 + $0x2c] sm:$0xf]
    %v64 = vld [vmem:[#allocation2 + $0x30] sm:$0xff]
    %v65 = vld [vmem:[#allocation2 + $0x38] sm:$0xf]
    %v66 = vld [vmem:[#allocation2 + $0x3c] sm:$0xff]
    %v67 = vld [vmem:[#allocation2 + $0x44] sm:$0xf]
    %v68 = vld [vmem:[#allocation2 + $0x48] sm:$0xff]
    %v69 = vld [vmem:[#allocation2 + $0x50] sm:$0xf]
    %v70 = vld [vmem:[#allocation2 + $0x54] sm:$0xff]
    %v71 = vld [vmem:[#allocation2 + $0x5c] sm:$0xf]
    %v72 = vld [vmem:[#allocation2 + $0x60] sm:$0xff]
    %v73 = vld [vmem:[#allocation2 + $0x68] sm:$0xf]
    %v74 = vld [vmem:[#allocation2 + $0x6c] sm:$0xff]
    %v75 = vld [vmem:[#allocation2 + $0x74] sm:$0xf]
    %v76 = vld [vmem:[#allocation2 + $0x78] sm:$0xff]
    %v77 = vld [vmem:[#allocation2 + $0x80] sm:$0xf]
    %v78 = vld [vmem:[#allocation2 + $0x84] sm:$0xff]
    %v79 = vld [vmem:[#allocation2 + $0x8c] sm:$0xf]
    %v80 = vld [vmem:[#allocation2 + $0x90] sm:$0xff]
    %v81 = vld [vmem:[#allocation2 + $0x98] sm:$0xf]
    %v82 = vld [vmem:[#allocation2 + $0x9c] sm:$0xff]
    %v83 = vld [vmem:[#allocation2 + $0xa4] sm:$0xf]
    %v84 = vld [vmem:[#allocation2 + $0xa8] sm:$0xff]
    %v85 = vld [vmem:[#allocation2 + $0xb0] sm:$0xf]
    %v86 = vld [vmem:[#allocation2 + $0xb4] sm:$0xff]
    %v87 = vld [vmem:[#allocation2 + $0xbc] sm:$0xf]
    %v88 = vld [vmem:[#allocation2 + $0xc0] sm:$0xff]
    %v89 = vld [vmem:[#allocation2 + $0xc8] sm:$0xf]
    %v90 = vld [vmem:[#allocation2 + $0xcc] sm:$0xff]
    %v91 = vld [vmem:[#allocation2 + $0xd4] sm:$0xf]
    %v92 = vld [vmem:[#allocation2 + $0xd8] sm:$0xff]
    %v93 = vld [vmem:[#allocation2 + $0xe0] sm:$0xf]
    %v94 = vld [vmem:[#allocation2 + $0xe4] sm:$0xff]
    %v95 = vld [vmem:[#allocation2 + $0xec] sm:$0xf]
    %v96 = vld [vmem:[#allocation2 + $0xf0] sm:$0xff]
    %v97 = vld [vmem:[#allocation2 + $0xf8] sm:$0xf]
    %v98 = vld [vmem:[#allocation2 + $0xfc] sm:$0xff]
    %v99 = vld [vmem:[#allocation2 + $0x104] sm:$0xf]
    %v100 = vld [vmem:[#allocation2 + $0x108] sm:$0xff]
    %v101 = vld [vmem:[#allocation2 + $0x110] sm:$0xf]
    %v102 = vld [vmem:[#allocation2 + $0x114] sm:$0xff]
    %v103 = vld [vmem:[#allocation2 + $0x11c] sm:$0xf]
    %v104 = vld [vmem:[#allocation2 + $0x120] sm:$0xff]
    %v105 = vld [vmem:[#allocation2 + $0x128] sm:$0xf]
    %v106 = vld [vmem:[#allocation2 + $0x12c] sm:$0xff]
    %v107 = vld [vmem:[#allocation2 + $0x134] sm:$0xf]
    %v108 = vld [vmem:[#allocation2 + $0x138] sm:$0xff]
    %v109 = vld [vmem:[#allocation2 + $0x140] sm:$0xf]
    %v110 = vld [vmem:[#allocation2 + $0x144] sm:$0xff]
    %v111 = vld [vmem:[#allocation2 + $0x14c] sm:$0xf]
    %v112 = vld [vmem:[#allocation2 + $0x150] sm:$0xff]
    %v113 = vld [vmem:[#allocation2 + $0x158] sm:$0xf]
    %v114 = vld [vmem:[#allocation2 + $0x15c] sm:$0xff]
    %v115 = vld [vmem:[#allocation2 + $0x164] sm:$0xf]
    %v116 = vld [vmem:[#allocation2 + $0x168] sm:$0xff]
    %v117 = vld [vmem:[#allocation2 + $0x170] sm:$0xf]
    %v118 = vld [vmem:[#allocation2 + $0x174] sm:$0xff]
    %v119 = vld [vmem:[#allocation2 + $0x17c] sm:$0xf]
    %v122 = vunpack.c.l.b16 %v50
    %v123 = vunpack.c.h.b16 %v50
    %v124 = vunpack.c.l.b16 %v51
    %v125 = vunpack.c.h.b16 %v51
    %v126 = vpack.c.b16 %v124, %v122
    %v127 = vpack.c.b16 %v125, %v123
    %v194 = vunpack.c.l.b16 %v56
    %v195 = vunpack.c.h.b16 %v56
    %v196 = vunpack.c.l.b16 %v57
    %v197 = vunpack.c.l.b16 %v58
    %v198 = vunpack.c.h.b16 %v58
    %v199 = vunpack.c.l.b16 %v59
    %v200 = vunpack.c.l.b16 %v60
    %v201 = vunpack.c.h.b16 %v60
    %v202 = vunpack.c.l.b16 %v61
    %v203 = vunpack.c.l.b16 %v62
    %v204 = vunpack.c.h.b16 %v62
    %v205 = vunpack.c.l.b16 %v63
    %v206 = vunpack.c.l.b16 %v64
    %v207 = vunpack.c.h.b16 %v64
    %v208 = vunpack.c.l.b16 %v65
    %v209 = vunpack.c.l.b16 %v66
    %v210 = vunpack.c.h.b16 %v66
    %v211 = vunpack.c.l.b16 %v67
    %v212 = vunpack.c.l.b16 %v68
    %v213 = vunpack.c.h.b16 %v68
    %v214 = vunpack.c.l.b16 %v69
    %v215 = vunpack.c.l.b16 %v70
    %v216 = vunpack.c.h.b16 %v70
    %v217 = vunpack.c.l.b16 %v71
    %v218 = vunpack.c.l.b16 %v72
    %v219 = vunpack.c.h.b16 %v72
    %v220 = vunpack.c.l.b16 %v73
    %v221 = vunpack.c.l.b16 %v74
    %v222 = vunpack.c.h.b16 %v74
    %v223 = vunpack.c.l.b16 %v75
    %v224 = vunpack.c.l.b16 %v76
    %v225 = vunpack.c.h.b16 %v76
    %v226 = vunpack.c.l.b16 %v77
    %v227 = vunpack.c.l.b16 %v78
    %v228 = vunpack.c.h.b16 %v78
    %v229 = vunpack.c.l.b16 %v79
    %v230 = vunpack.c.l.b16 %v80
    %v231 = vunpack.c.h.b16 %v80
    %v232 = vunpack.c.l.b16 %v81
    %v233 = vunpack.c.l.b16 %v82
    %v234 = vunpack.c.h.b16 %v82
    %v235 = vunpack.c.l.b16 %v83
    %v236 = vunpack.c.l.b16 %v84
    %v237 = vunpack.c.h.b16 %v84
    %v238 = vunpack.c.l.b16 %v85
    %v239 = vunpack.c.l.b16 %v86
    %v240 = vunpack.c.h.b16 %v86
    %v241 = vunpack.c.l.b16 %v87
    %v242 = vunpack.c.l.b16 %v88
    %v243 = vunpack.c.h.b16 %v88
    %v244 = vunpack.c.l.b16 %v89
    %v245 = vunpack.c.l.b16 %v90
    %v246 = vunpack.c.h.b16 %v90
    %v247 = vunpack.c.l.b16 %v91
    %v248 = vunpack.c.l.b16 %v92
    %v249 = vunpack.c.h.b16 %v92
    %v250 = vunpack.c.l.b16 %v93
    %v251 = vunpack.c.l.b16 %v94
    %v252 = vunpack.c.h.b16 %v94
    %v253 = vunpack.c.l.b16 %v95
    %v254 = vunpack.c.l.b16 %v96
    %v255 = vunpack.c.h.b16 %v96
    %v256 = vunpack.c.l.b16 %v97
    %v257 = vunpack.c.l.b16 %v98
    %v258 = vunpack.c.h.b16 %v98
    %v259 = vunpack.c.l.b16 %v99
    %v260 = vunpack.c.l.b16 %v100
    %v261 = vunpack.c.h.b16 %v100
    %v262 = vunpack.c.l.b16 %v101
    %v263 = vunpack.c.l.b16 %v102
    %v264 = vunpack.c.h.b16 %v102
    %v265 = vunpack.c.l.b16 %v103
    %v266 = vunpack.c.l.b16 %v104
    %v267 = vunpack.c.h.b16 %v104
    %v268 = vunpack.c.l.b16 %v105
    %v269 = vunpack.c.l.b16 %v106
    %v270 = vunpack.c.h.b16 %v106
    %v271 = vunpack.c.l.b16 %v107
    %v272 = vunpack.c.l.b16 %v108
    %v273 = vunpack.c.h.b16 %v108
    %v274 = vunpack.c.l.b16 %v109
    %v275 = vunpack.c.l.b16 %v110
    %v276 = vunpack.c.h.b16 %v110
    %v277 = vunpack.c.l.b16 %v111
    %v278 = vunpack.c.l.b16 %v112
    %v279 = vunpack.c.h.b16 %v112
    %v280 = vunpack.c.l.b16 %v113
    %v281 = vunpack.c.l.b16 %v114
    %v282 = vunpack.c.h.b16 %v114
    %v283 = vunpack.c.l.b16 %v115
    %v284 = vunpack.c.l.b16 %v116
    %v285 = vunpack.c.h.b16 %v116
    %v286 = vunpack.c.l.b16 %v117
    %v287 = vunpack.c.l.b16 %v118
    %v288 = vunpack.c.h.b16 %v118
    %v289 = vunpack.c.l.b16 %v119
    %v290 = vpack.c.b16 %v197, %v194
    %v291 = vpack.c.b16 %v198, %v195
    %v292 = vpack.c.b16 %v199, %v196
    %v293 = vpack.c.b16 %v203, %v200
    %v294 = vpack.c.b16 %v204, %v201
    %v295 = vpack.c.b16 %v205, %v202
    %v296 = vpack.c.b16 %v209, %v206
    %v297 = vpack.c.b16 %v210, %v207
    %v298 = vpack.c.b16 %v211, %v208
    %v299 = vpack.c.b16 %v215, %v212
    %v300 = vpack.c.b16 %v216, %v213
    %v301 = vpack.c.b16 %v217, %v214
    %v302 = vpack.c.b16 %v221, %v218
    %v303 = vpack.c.b16 %v222, %v219
    %v304 = vpack.c.b16 %v223, %v220
    %v305 = vpack.c.b16 %v227, %v224
    %v306 = vpack.c.b16 %v228, %v225
    %v307 = vpack.c.b16 %v229, %v226
    %v308 = vpack.c.b16 %v233, %v230
    %v309 = vpack.c.b16 %v234, %v231
    %v310 = vpack.c.b16 %v235, %v232
    %v311 = vpack.c.b16 %v239, %v236
    %v312 = vpack.c.b16 %v240, %v237
    %v313 = vpack.c.b16 %v241, %v238
    %v314 = vpack.c.b16 %v245, %v242
    %v315 = vpack.c.b16 %v246, %v243
    %v316 = vpack.c.b16 %v247, %v244
    %v317 = vpack.c.b16 %v251, %v248
    %v318 = vpack.c.b16 %v252, %v249
    %v319 = vpack.c.b16 %v253, %v250
    %v320 = vpack.c.b16 %v257, %v254
    %v321 = vpack.c.b16 %v258, %v255
    %v322 = vpack.c.b16 %v259, %v256
    %v323 = vpack.c.b16 %v263, %v260
    %v324 = vpack.c.b16 %v264, %v261
    %v325 = vpack.c.b16 %v265, %v262
    %v326 = vpack.c.b16 %v269, %v266
    %v327 = vpack.c.b16 %v270, %v267
    %v328 = vpack.c.b16 %v271, %v268
    %v329 = vpack.c.b16 %v275, %v272
    %v330 = vpack.c.b16 %v276, %v273
    %v331 = vpack.c.b16 %v277, %v274
    %v332 = vpack.c.b16 %v281, %v278
    %v333 = vpack.c.b16 %v282, %v279
    %v334 = vpack.c.b16 %v283, %v280
    %v335 = vpack.c.b16 %v287, %v284
    %v336 = vpack.c.b16 %v288, %v285
    %v337 = vpack.c.b16 %v289, %v286
    %386 = vmatprep.subr.bf16.mxu0 %v291
    %387 = vmatpush1.bf16.msra.mxu0 %v290
    %388 = vmatprep.subr.bf16.mxu0 %v294
    %389 = vmatpush1.bf16.msra.mxu0 %v293
    %390 = vmatprep.subr.bf16.mxu0 %v297
    %391 = vmatpush1.bf16.msra.mxu0 %v296
    %392 = vmatprep.subr.bf16.mxu0 %v300
    %393 = vmatpush1.bf16.msra.mxu0 %v299
    %394 = vmatprep.subr.bf16.mxu0 %v303
    %395 = vmatpush1.bf16.msra.mxu0 %v302
    %396 = vmatprep.subr.bf16.mxu0 %v306
    %397 = vmatpush1.bf16.msra.mxu0 %v305
    %398 = vmatprep.subr.bf16.mxu0 %v309
    %399 = vmatpush1.bf16.msra.mxu0 %v308
    %400 = vmatprep.subr.bf16.mxu0 %v312
    %401 = vmatpush1.bf16.msra.mxu0 %v311
    %402 = vmatprep.subr.bf16.mxu0 %v315
    %403 = vmatpush1.bf16.msra.mxu0 %v314
    %404 = vmatprep.subr.bf16.mxu0 %v318
    %405 = vmatpush1.bf16.msra.mxu0 %v317
    %406 = vmatprep.subr.bf16.mxu0 %v321
    %407 = vmatpush1.bf16.msra.mxu0 %v320
    %408 = vmatprep.subr.bf16.mxu0 %v324
    %409 = vmatpush1.bf16.msra.mxu0 %v323
    %410 = vmatprep.subr.bf16.mxu0 %v327
    %411 = vmatpush1.bf16.msra.mxu0 %v326
    %412 = vmatprep.subr.bf16.mxu0 %v330
    %413 = vmatpush1.bf16.msra.mxu0 %v329
    %414 = vmatprep.subr.bf16.mxu0 %v333
    %415 = vmatpush1.bf16.msra.mxu0 %v332
    %416 = vmatprep.subr.bf16.mxu0 %v336
    %417 = vmatpush1.bf16.msra.mxu0 %v335
    %418 = vmatprep.mubr.bf16.mxu0 %v127
    %419 = vmatmul.mubr.bf16.gmra.mrb[0].mxu0 %v126
    %v420 = vpop.f32.mrb[0].mxu0
    %v421 = vadd.f32 0.0, %v420
    %v422 = vpop.f32.mrb[0].mxu0
    %v423 = vadd.f32 0.0, %v422
    %v424 = vpop.f32.mrb[0].mxu0
    %v425 = vadd.f32 0.0, %v424
    %v426 = vpop.f32.mrb[0].mxu0
    %v427 = vadd.f32 0.0, %v426
    %428 = vdwg.mxu0
    %429 = vmatprep.subr.bf16.mxu0 0
    %430 = vmatpush1.bf16.msra.mxu0 %v292
    %431 = vmatprep.subr.bf16.mxu0 0
    %432 = vmatpush1.bf16.msra.mxu0 %v295
    %433 = vmatprep.subr.bf16.mxu0 0
    %434 = vmatpush1.bf16.msra.mxu0 %v298
    %435 = vmatprep.subr.bf16.mxu0 0
    %436 = vmatpush1.bf16.msra.mxu0 %v301
    %437 = vmatprep.subr.bf16.mxu0 0
    %438 = vmatpush1.bf16.msra.mxu0 %v304
    %439 = vmatprep.subr.bf16.mxu0 0
    %440 = vmatpush1.bf16.msra.mxu0 %v307
    %441 = vmatprep.subr.bf16.mxu0 0
    %442 = vmatpush1.bf16.msra.mxu0 %v310
    %443 = vmatprep.subr.bf16.mxu0 0
    %444 = vmatpush1.bf16.msra.mxu0 %v313
    %445 = vmatprep.subr.bf16.mxu0 0
    %446 = vmatpush1.bf16.msra.mxu0 %v316
    %447 = vmatprep.subr.bf16.mxu0 0
    %448 = vmatpush1.bf16.msra.mxu0 %v319
    %449 = vmatprep.subr.bf16.mxu0 0
    %450 = vmatpush1.bf16.msra.mxu0 %v322
    %451 = vmatprep.subr.bf16.mxu0 0
    %452 = vmatpush1.bf16.msra.mxu0 %v325
    %453 = vmatprep.subr.bf16.mxu0 0
    %454 = vmatpush1.bf16.msra.mxu0 %v328
    %455 = vmatprep.subr.bf16.mxu0 0
    %456 = vmatpush1.bf16.msra.mxu0 %v331
    %457 = vmatprep.subr.bf16.mxu0 0
    %458 = vmatpush1.bf16.msra.mxu0 %v334
    %459 = vmatprep.subr.bf16.mxu0 0
    %460 = vmatpush1.bf16.msra.mxu0 %v337
    %461 = vmatprep.mubr.bf16.mxu0 %v127
    %462 = vmatmul.mubr.bf16.gmra.mrb[0].mxu0 %v126
    %v463 = vpop.f32.mrb[0].mxu0
    %v464 = vadd.f32 0.0, %v463
    %v465 = vpop.f32.mrb[0].mxu0
    %v466 = vpop.f32.mrb[0].mxu0
    %v467 = vadd.f32 0.0, %v466
    %v468 = vpop.f32.mrb[0].mxu0
    %469 = vdwg.mxu0
    %vm470 = vcmp.gt.f32.partialorder %v421, 0.0
    %vm471 = vcmp.gt.f32.partialorder %v423, 0.0
    %vm472 = vcmp.gt.f32.partialorder %v464, 0.0
    %vm473 = vcmp.gt.f32.partialorder %v425, 0.0
    %vm474 = vcmp.gt.f32.partialorder %v427, 0.0
    %vm475 = vcmp.gt.f32.partialorder %v467, 0.0
    %v476 = vmul.f32 %v421, 0.01
    %v477 = vmul.f32 %v423, 0.01
    %v478 = vmul.f32 %v464, 0.01
    %v479 = vmul.f32 %v425, 0.01
    %v480 = vmul.f32 %v427, 0.01
    %v481 = vmul.f32 %v467, 0.01
    %v482 = vsel %vm470, %v421, %v476
    %v483 = vsel %vm471, %v423, %v477
    %v484 = vsel %vm472, %v464, %v478
    %v485 = vsel %vm473, %v425, %v479
    %v486 = vsel %vm474, %v427, %v480
    %v487 = vsel %vm475, %v467, %v481
    %v488 = vpack.c.bf16 %v485, %v482
    %v489 = vpack.c.bf16 %v486, %v483
    %v490 = vpack.c.bf16 %v487, %v484
    %v491 = vld [vmem:[%s2] sm:$0xf]
    %v492 = vld [vmem:[%s2 + $0x4] sm:$0xf]
    %v493 = vld [vmem:[%s2 + $0x8] sm:$0xf]
    %v494 = vld [vmem:[%s2 + $0xc] sm:$0xf]
    %v495 = vld [vmem:[%s2 + $0x10] sm:$0xf]
    %v496 = vld [vmem:[%s2 + $0x14] sm:$0xf]
    %v497 = vld [vmem:[%s2 + $0x18] sm:$0xf]
    %v498 = vld [vmem:[%s2 + $0x1c] sm:$0xf]
    %v499 = vld [vmem:[%s2 + $0x20] sm:$0xf]
    %v500 = vld [vmem:[%s2 + $0x24] sm:$0xf]
    %v501 = vld [vmem:[%s2 + $0x28] sm:$0xf]
    %v502 = vld [vmem:[%s2 + $0x2c] sm:$0xf]
    %v503 = vld [vmem:[%s2 + $0x30] sm:$0xf]
    %v504 = vld [vmem:[%s2 + $0x34] sm:$0xf]
    %v505 = vld [vmem:[%s2 + $0x38] sm:$0xf]
    %v506 = vld [vmem:[%s2 + $0x3c] sm:$0xf]
    %v507 = vld [vmem:[%s2 + $0x40] sm:$0xf]
    %v508 = vld [vmem:[%s2 + $0x44] sm:$0xf]
    %v509 = vld [vmem:[%s2 + $0x48] sm:$0xf]
    %v510 = vld [vmem:[%s2 + $0x4c] sm:$0xf]
    %v511 = vld [vmem:[%s2 + $0x50] sm:$0xf]
    %v512 = vld [vmem:[%s2 + $0x54] sm:$0xf]
    %v513 = vld [vmem:[%s2 + $0x58] sm:$0xf]
    %v514 = vld [vmem:[%s2 + $0x5c] sm:$0xf]
    %v515 = vld [vmem:[%s2 + $0x60] sm:$0xf]
    %v516 = vld [vmem:[%s2 + $0x64] sm:$0xf]
    %v517 = vld [vmem:[%s2 + $0x68] sm:$0xf]
    %v518 = vld [vmem:[%s2 + $0x6c] sm:$0xf]
    %v519 = vld [vmem:[%s2 + $0x70] sm:$0xf]
    %v520 = vld [vmem:[%s2 + $0x74] sm:$0xf]
    %v521 = vld [vmem:[%s2 + $0x78] sm:$0xf]
    %v522 = vld [vmem:[%s2 + $0x7c] sm:$0xf]
    %v523 = vld [vmem:[%s2 + $0x80] sm:$0xf]
    %v524 = vld [vmem:[%s2 + $0x84] sm:$0xf]
    %v525 = vld [vmem:[%s2 + $0x88] sm:$0xf]
    %v526 = vld [vmem:[%s2 + $0x8c] sm:$0xf]
    %v527 = vld [vmem:[%s2 + $0x90] sm:$0xf]
    %v528 = vld [vmem:[%s2 + $0x94] sm:$0xf]
    %v529 = vld [vmem:[%s2 + $0x98] sm:$0xf]
    %v530 = vld [vmem:[%s2 + $0x9c] sm:$0xf]
    %v531 = vld [vmem:[%s2 + $0xa0] sm:$0xf]
    %v532 = vld [vmem:[%s2 + $0xa4] sm:$0xf]
    %v533 = vld [vmem:[%s2 + $0xa8] sm:$0xf]
    %v534 = vld [vmem:[%s2 + $0xac] sm:$0xf]
    %v535 = vld [vmem:[%s2 + $0xb0] sm:$0xf]
    %v536 = vld [vmem:[%s2 + $0xb4] sm:$0xf]
    %v537 = vld [vmem:[%s2 + $0xb8] sm:$0xf]
    %v538 = vld [vmem:[%s2 + $0xbc] sm:$0xf]
    %v587 = vunpack.c.l.b16 %v491
    %v588 = vunpack.c.l.b16 %v492
    %v589 = vunpack.c.l.b16 %v493
    %v590 = vunpack.c.l.b16 %v494
    %v591 = vunpack.c.l.b16 %v495
    %v592 = vunpack.c.l.b16 %v496
    %v593 = vunpack.c.l.b16 %v497
    %v594 = vunpack.c.l.b16 %v498
    %v595 = vunpack.c.l.b16 %v499
    %v596 = vunpack.c.l.b16 %v500
    %v597 = vunpack.c.l.b16 %v501
    %v598 = vunpack.c.l.b16 %v502
    %v599 = vunpack.c.l.b16 %v503
    %v600 = vunpack.c.l.b16 %v504
    %v601 = vunpack.c.l.b16 %v505
    %v602 = vunpack.c.l.b16 %v506
    %v603 = vunpack.c.l.b16 %v507
    %v604 = vunpack.c.l.b16 %v508
    %v605 = vunpack.c.l.b16 %v509
    %v606 = vunpack.c.l.b16 %v510
    %v607 = vunpack.c.l.b16 %v511
    %v608 = vunpack.c.l.b16 %v512
    %v609 = vunpack.c.l.b16 %v513
    %v610 = vunpack.c.l.b16 %v514
    %v611 = vunpack.c.l.b16 %v515
    %v612 = vunpack.c.l.b16 %v516
    %v613 = vunpack.c.l.b16 %v517
    %v614 = vunpack.c.l.b16 %v518
    %v615 = vunpack.c.l.b16 %v519
    %v616 = vunpack.c.l.b16 %v520
    %v617 = vunpack.c.l.b16 %v521
    %v618 = vunpack.c.l.b16 %v522
    %v619 = vunpack.c.l.b16 %v523
    %v620 = vunpack.c.l.b16 %v524
    %v621 = vunpack.c.l.b16 %v525
    %v622 = vunpack.c.l.b16 %v526
    %v623 = vunpack.c.l.b16 %v527
    %v624 = vunpack.c.l.b16 %v528
    %v625 = vunpack.c.l.b16 %v529
    %v626 = vunpack.c.l.b16 %v530
    %v627 = vunpack.c.l.b16 %v531
    %v628 = vunpack.c.l.b16 %v532
    %v629 = vunpack.c.l.b16 %v533
    %v630 = vunpack.c.l.b16 %v534
    %v631 = vunpack.c.l.b16 %v535
    %v632 = vunpack.c.l.b16 %v536
    %v633 = vunpack.c.l.b16 %v537
    %v634 = vunpack.c.l.b16 %v538
    %v635 = vpack.c.b16 %v588, %v587
    %v636 = vpack.c.b16 %v590, %v589
    %v637 = vpack.c.b16 %v592, %v591
    %v638 = vpack.c.b16 %v594, %v593
    %v639 = vpack.c.b16 %v596, %v595
    %v640 = vpack.c.b16 %v598, %v597
    %v641 = vpack.c.b16 %v600, %v599
    %v642 = vpack.c.b16 %v602, %v601
    %v643 = vpack.c.b16 %v604, %v603
    %v644 = vpack.c.b16 %v606, %v605
    %v645 = vpack.c.b16 %v608, %v607
    %v646 = vpack.c.b16 %v610, %v609
    %v647 = vpack.c.b16 %v612, %v611
    %v648 = vpack.c.b16 %v614, %v613
    %v649 = vpack.c.b16 %v616, %v615
    %v650 = vpack.c.b16 %v618, %v617
    %v651 = vpack.c.b16 %v620, %v619
    %v652 = vpack.c.b16 %v622, %v621
    %v653 = vpack.c.b16 %v624, %v623
    %v654 = vpack.c.b16 %v626, %v625
    %v655 = vpack.c.b16 %v628, %v627
    %v656 = vpack.c.b16 %v630, %v629
    %v657 = vpack.c.b16 %v632, %v631
    %v658 = vpack.c.b16 %v634, %v633
    %683 = vmatprep.subr.bf16.mxu0 0
    %684 = vmatpush1.bf16.msra.mxu0 %v635
    %685 = vmatprep.subr.bf16.mxu0 0
    %686 = vmatpush1.bf16.msra.mxu0 %v636
    %687 = vmatprep.subr.bf16.mxu0 0
    %688 = vmatpush1.bf16.msra.mxu0 %v637
    %689 = vmatprep.subr.bf16.mxu0 0
    %690 = vmatpush1.bf16.msra.mxu0 %v638
    %691 = vmatprep.subr.bf16.mxu0 0
    %692 = vmatpush1.bf16.msra.mxu0 %v639
    %693 = vmatprep.subr.bf16.mxu0 0
    %694 = vmatpush1.bf16.msra.mxu0 %v640
    %695 = vmatprep.subr.bf16.mxu0 0
    %696 = vmatpush1.bf16.msra.mxu0 %v641
    %697 = vmatprep.subr.bf16.mxu0 0
    %698 = vmatpush1.bf16.msra.mxu0 %v642
    %699 = vmatprep.subr.bf16.mxu0 0
    %700 = vmatpush1.bf16.msra.mxu0 %v643
    %701 = vmatprep.subr.bf16.mxu0 0
    %702 = vmatpush1.bf16.msra.mxu0 %v644
    %703 = vmatprep.subr.bf16.mxu0 0
    %704 = vmatpush1.bf16.msra.mxu0 %v645
    %705 = vmatprep.subr.bf16.mxu0 0
    %706 = vmatpush1.bf16.msra.mxu0 %v646
    %707 = vmatprep.subr.bf16.mxu0 0
    %708 = vmatpush1.bf16.msra.mxu0 %v647
    %709 = vmatprep.subr.bf16.mxu0 0
    %710 = vmatpush1.bf16.msra.mxu0 %v648
    %711 = vmatprep.subr.bf16.mxu0 0
    %712 = vmatpush1.bf16.msra.mxu0 %v649
    %713 = vmatprep.subr.bf16.mxu0 0
    %714 = vmatpush1.bf16.msra.mxu0 %v650
    %715 = vmatprep.mubr.bf16.mxu0 %v489
    %716 = vmatmul.mubr.bf16.gmra.mrb[0].mxu0 %v488
    %v717 = vpop.f32.mrb[0].mxu0
    %v718 = vadd.f32 0.0, %v717
    %v719 = vpop.f32.mrb[0].mxu0
    %v720 = vpop.f32.mrb[0].mxu0
    %v721 = vadd.f32 0.0, %v720
    %v722 = vpop.f32.mrb[0].mxu0
    %723 = vdwg.mxu0
    %724 = vmatprep.subr.bf16.mxu0 0
    %725 = vmatpush1.bf16.msra.mxu0 %v651
    %726 = vmatprep.subr.bf16.mxu0 0
    %727 = vmatpush1.bf16.msra.mxu0 %v652
    %728 = vmatprep.subr.bf16.mxu0 0
    %729 = vmatpush1.bf16.msra.mxu0 %v653
    %730 = vmatprep.subr.bf16.mxu0 0
    %731 = vmatpush1.bf16.msra.mxu0 %v654
    %732 = vmatprep.subr.bf16.mxu0 0
    %733 = vmatpush1.bf16.msra.mxu0 %v655
    %734 = vmatprep.subr.bf16.mxu0 0
    %735 = vmatpush1.bf16.msra.mxu0 %v656
    %736 = vmatprep.subr.bf16.mxu0 0
    %737 = vmatpush1.bf16.msra.mxu0 %v657
    %738 = vmatprep.subr.bf16.mxu0 0
    %739 = vmatpush1.bf16.msra.mxu0 %v658
    %740 = vmatprep.subr.bf16.mxu0 0
    %741 = vmatpush1.bf16.msra.mxu0 0
    %742 = vmatprep.subr.bf16.mxu0 0
    %743 = vmatpush1.bf16.msra.mxu0 0
    %744 = vmatprep.subr.bf16.mxu0 0
    %745 = vmatpush1.bf16.msra.mxu0 0
    %746 = vmatprep.subr.bf16.mxu0 0
    %747 = vmatpush1.bf16.msra.mxu0 0
    %748 = vmatprep.subr.bf16.mxu0 0
    %749 = vmatpush1.bf16.msra.mxu0 0
    %750 = vmatprep.subr.bf16.mxu0 0
    %751 = vmatpush1.bf16.msra.mxu0 0
    %752 = vmatprep.subr.bf16.mxu0 0
    %753 = vmatpush1.bf16.msra.mxu0 0
    %754 = vmatprep.subr.bf16.mxu0 0
    %755 = vmatpush1.bf16.msra.mxu0 0
    %756 = vmatprep.mubr.bf16.mxu0 0
    %757 = vmatmul.mubr.bf16.gmra.mrb[0].mxu0 %v490
    %v758 = vpop.f32.mrb[0].mxu0
    %v759 = vadd.f32 %v718, %v758
    %v760 = vpop.f32.mrb[0].mxu0
    %v761 = vpop.f32.mrb[0].mxu0
    %v762 = vadd.f32 %v721, %v761
    %v763 = vpop.f32.mrb[0].mxu0
    %764 = vdwg.mxu0
    %v765 = vpack.c.bf16 %v762, %v759
    %v766 = vld [vmem:[%s3] sm:$0xff]
    %v767 = vld [vmem:[%s3 + $0x8] sm:$0xf]
    %v768 = vld [vmem:[%s3 + $0xc] sm:$0xff]
    %v769 = vld [vmem:[%s3 + $0x14] sm:$0xf]
    %v770 = vld [vmem:[%s3 + $0x18] sm:$0xff]
    %v771 = vld [vmem:[%s3 + $0x20] sm:$0xf]
    %v772 = vld [vmem:[%s3 + $0x24] sm:$0xff]
    %v773 = vld [vmem:[%s3 + $0x2c] sm:$0xf]
    %v782 = vunpack.c.l.b16 %v766
    %v783 = vunpack.c.h.b16 %v766
    %v784 = vunpack.c.l.b16 %v767
    %v785 = vunpack.c.l.b16 %v768
    %v786 = vunpack.c.h.b16 %v768
    %v787 = vunpack.c.l.b16 %v769
    %v788 = vunpack.c.l.b16 %v770
    %v789 = vunpack.c.h.b16 %v770
    %v790 = vunpack.c.l.b16 %v771
    %v791 = vunpack.c.l.b16 %v772
    %v792 = vunpack.c.h.b16 %v772
    %v793 = vunpack.c.l.b16 %v773
    %v794 = vpack.c.b16 %v785, %v782
    %v795 = vpack.c.b16 %v786, %v783
    %v796 = vpack.c.b16 %v787, %v784
    %v797 = vpack.c.b16 %v791, %v788
    %v798 = vpack.c.b16 %v792, %v789
    %v799 = vpack.c.b16 %v793, %v790
    %vm806 = vcmask 261120
    %v808 = vsel %vm806, %v765, 0
    %810 = vmatprep.subr.bf16.mxu0 %v795
    %811 = vmatpush1.bf16.msra.mxu0 %v794
    %812 = vmatprep.subr.bf16.mxu0 %v798
    %813 = vmatpush1.bf16.msra.mxu0 %v797
    %814 = vmatprep.subr.bf16.mxu0 0
    %815 = vmatpush1.bf16.msra.mxu0 0
    %816 = vmatprep.subr.bf16.mxu0 0
    %817 = vmatpush1.bf16.msra.mxu0 0
    %818 = vmatprep.subr.bf16.mxu0 0
    %819 = vmatpush1.bf16.msra.mxu0 0
    %820 = vmatprep.subr.bf16.mxu0 0
    %821 = vmatpush1.bf16.msra.mxu0 0
    %822 = vmatprep.subr.bf16.mxu0 0
    %823 = vmatpush1.bf16.msra.mxu0 0
    %824 = vmatprep.subr.bf16.mxu0 0
    %825 = vmatpush1.bf16.msra.mxu0 0
    %826 = vmatprep.subr.bf16.mxu0 0
    %827 = vmatpush1.bf16.msra.mxu0 0
    %828 = vmatprep.subr.bf16.mxu0 0
    %829 = vmatpush1.bf16.msra.mxu0 0
    %830 = vmatprep.subr.bf16.mxu0 0
    %831 = vmatpush1.bf16.msra.mxu0 0
    %832 = vmatprep.subr.bf16.mxu0 0
    %833 = vmatpush1.bf16.msra.mxu0 0
    %834 = vmatprep.subr.bf16.mxu0 0
    %835 = vmatpush1.bf16.msra.mxu0 0
    %836 = vmatprep.subr.bf16.mxu0 0
    %837 = vmatpush1.bf16.msra.mxu0 0
    %838 = vmatprep.subr.bf16.mxu0 0
    %839 = vmatpush1.bf16.msra.mxu0 0
    %840 = vmatprep.subr.bf16.mxu0 0
    %841 = vmatpush1.bf16.msra.mxu0 0
    %842 = vmatprep.mubr.bf16.mxu0 0
    %843 = vmatmul.mubr.bf16.gmra.mrb[0].mxu0 %v808
    %v844 = vpop.f32.mrb[0].mxu0
    %v845 = vadd.f32 0.0, %v844
    %v846 = vpop.f32.mrb[0].mxu0
    %v847 = vadd.f32 0.0, %v846
    %v848 = vpop.f32.mrb[0].mxu0
    %v849 = vadd.f32 0.0, %v848
    %v850 = vpop.f32.mrb[0].mxu0
    %v851 = vadd.f32 0.0, %v850
    %852 = vdwg.mxu0
    %853 = vmatprep.subr.bf16.mxu0 0
    %854 = vmatpush1.bf16.msra.mxu0 %v796
    %855 = vmatprep.subr.bf16.mxu0 0
    %856 = vmatpush1.bf16.msra.mxu0 %v799
    %857 = vmatprep.subr.bf16.mxu0 0
    %858 = vmatpush1.bf16.msra.mxu0 0
    %859 = vmatprep.subr.bf16.mxu0 0
    %860 = vmatpush1.bf16.msra.mxu0 0
    %861 = vmatprep.subr.bf16.mxu0 0
    %862 = vmatpush1.bf16.msra.mxu0 0
    %863 = vmatprep.subr.bf16.mxu0 0
    %864 = vmatpush1.bf16.msra.mxu0 0
    %865 = vmatprep.subr.bf16.mxu0 0
    %866 = vmatpush1.bf16.msra.mxu0 0
    %867 = vmatprep.subr.bf16.mxu0 0
    %868 = vmatpush1.bf16.msra.mxu0 0
    %869 = vmatprep.subr.bf16.mxu0 0
    %870 = vmatpush1.bf16.msra.mxu0 0
    %871 = vmatprep.subr.bf16.mxu0 0
    %872 = vmatpush1.bf16.msra.mxu0 0
    %873 = vmatprep.subr.bf16.mxu0 0
    %874 = vmatpush1.bf16.msra.mxu0 0
    %875 = vmatprep.subr.bf16.mxu0 0
    %876 = vmatpush1.bf16.msra.mxu0 0
    %877 = vmatprep.subr.bf16.mxu0 0
    %878 = vmatpush1.bf16.msra.mxu0 0
    %879 = vmatprep.subr.bf16.mxu0 0
    %880 = vmatpush1.bf16.msra.mxu0 0
    %881 = vmatprep.subr.bf16.mxu0 0
    %882 = vmatpush1.bf16.msra.mxu0 0
    %883 = vmatprep.subr.bf16.mxu0 0
    %884 = vmatpush1.bf16.msra.mxu0 0
    %885 = vmatprep.mubr.bf16.mxu0 0
    %886 = vmatmul.mubr.bf16.gmra.mrb[0].mxu0 %v808
    %v887 = vpop.f32.mrb[0].mxu0
    %v888 = vadd.f32 0.0, %v887
    %v889 = vpop.f32.mrb[0].mxu0
    %v890 = vpop.f32.mrb[0].mxu0
    %v891 = vadd.f32 0.0, %v890
    %v892 = vpop.f32.mrb[0].mxu0
    %893 = vdwg.mxu0
    %vm894 = vcmp.gt.f32.partialorder %v845, 0.0
    %vm895 = vcmp.gt.f32.partialorder %v847, 0.0
    %vm896 = vcmp.gt.f32.partialorder %v888, 0.0
    %vm897 = vcmp.gt.f32.partialorder %v849, 0.0
    %vm898 = vcmp.gt.f32.partialorder %v851, 0.0
    %vm899 = vcmp.gt.f32.partialorder %v891, 0.0
    %v900 = vmul.f32 %v845, 0.01
    %v901 = vmul.f32 %v847, 0.01
    %v902 = vmul.f32 %v888, 0.01
    %v903 = vmul.f32 %v849, 0.01
    %v904 = vmul.f32 %v851, 0.01
    %v905 = vmul.f32 %v891, 0.01
    %v906 = vsel %vm894, %v845, %v900
    %v907 = vsel %vm895, %v847, %v901
    %v908 = vsel %vm896, %v888, %v902
    %v909 = vsel %vm897, %v849, %v903
    %v910 = vsel %vm898, %v851, %v904
    %v911 = vsel %vm899, %v891, %v905
    %v912 = vpack.c.bf16 %v909, %v906
    %v913 = vpack.c.bf16 %v910, %v907
    %v914 = vpack.c.bf16 %v911, %v908
    %v915 = vld [vmem:[#allocation5] sm:$0xff]
    %v916 = vld [vmem:[#allocation5 + $0x8] sm:$0xff]
    %v917 = vld [vmem:[#allocation5 + $0x10] sm:$0xff]
    %v918 = vld [vmem:[#allocation5 + $0x18] sm:$0xff]
    %v919 = vld [vmem:[#allocation5 + $0x20] sm:$0xff]
    %v920 = vld [vmem:[#allocation5 + $0x28] sm:$0xff]
    %v921 = vld [vmem:[#allocation5 + $0x30] sm:$0xff]
    %v922 = vld [vmem:[#allocation5 + $0x38] sm:$0xff]
    %v923 = vld [vmem:[#allocation5 + $0x40] sm:$0xff]
    %v924 = vld [vmem:[#allocation5 + $0x48] sm:$0xff]
    %v925 = vld [vmem:[#allocation5 + $0x50] sm:$0xff]
    %v926 = vld [vmem:[#allocation5 + $0x58] sm:$0xff]
    %v927 = vld [vmem:[#allocation5 + $0x60] sm:$0xff]
    %v928 = vld [vmem:[#allocation5 + $0x68] sm:$0xff]
    %v929 = vld [vmem:[#allocation5 + $0x70] sm:$0xff]
    %v930 = vld [vmem:[#allocation5 + $0x78] sm:$0xff]
    %v931 = vld [vmem:[#allocation5 + $0x80] sm:$0xff]
    %v932 = vld [vmem:[#allocation5 + $0x88] sm:$0xff]
    %v933 = vld [vmem:[#allocation5 + $0x90] sm:$0xff]
    %v934 = vld [vmem:[#allocation5 + $0x98] sm:$0xff]
    %v935 = vld [vmem:[#allocation5 + $0xa0] sm:$0xff]
    %v936 = vld [vmem:[#allocation5 + $0xa8] sm:$0xff]
    %v937 = vld [vmem:[#allocation5 + $0xb0] sm:$0xff]
    %v938 = vld [vmem:[#allocation5 + $0xb8] sm:$0xff]
    %v939 = vld [vmem:[#allocation5 + $0xc0] sm:$0xff]
    %v940 = vld [vmem:[#allocation5 + $0xc8] sm:$0xff]
    %v941 = vld [vmem:[#allocation5 + $0xd0] sm:$0xff]
    %v942 = vld [vmem:[#allocation5 + $0xd8] sm:$0xff]
    %v943 = vld [vmem:[#allocation5 + $0xe0] sm:$0xff]
    %v944 = vld [vmem:[#allocation5 + $0xe8] sm:$0xff]
    %v945 = vld [vmem:[#allocation5 + $0xf0] sm:$0xff]
    %v946 = vld [vmem:[#allocation5 + $0xf8] sm:$0xff]
    %v947 = vld [vmem:[#allocation5 + $0x100] sm:$0xff]
    %v948 = vld [vmem:[#allocation5 + $0x108] sm:$0xff]
    %v949 = vld [vmem:[#allocation5 + $0x110] sm:$0xff]
    %v950 = vld [vmem:[#allocation5 + $0x118] sm:$0xff]
    %v951 = vld [vmem:[#allocation5 + $0x120] sm:$0xff]
    %v952 = vld [vmem:[#allocation5 + $0x128] sm:$0xff]
    %v953 = vld [vmem:[#allocation5 + $0x130] sm:$0xff]
    %v954 = vld [vmem:[#allocation5 + $0x138] sm:$0xff]
    %v955 = vld [vmem:[#allocation5 + $0x140] sm:$0xff]
    %v956 = vld [vmem:[#allocation5 + $0x148] sm:$0xff]
    %v957 = vld [vmem:[#allocation5 + $0x150] sm:$0xff]
    %v958 = vld [vmem:[#allocation5 + $0x158] sm:$0xff]
    %v959 = vld [vmem:[#allocation5 + $0x160] sm:$0xff]
    %v960 = vld [vmem:[#allocation5 + $0x168] sm:$0xff]
    %v961 = vld [vmem:[#allocation5 + $0x170] sm:$0xff]
    %v962 = vld [vmem:[#allocation5 + $0x178] sm:$0xff]
    %v1011 = vunpack.c.l.b16 %v915
    %v1012 = vunpack.c.h.b16 %v915
    %v1013 = vunpack.c.l.b16 %v916
    %v1014 = vunpack.c.h.b16 %v916
    %v1015 = vunpack.c.l.b16 %v917
    %v1016 = vunpack.c.h.b16 %v917
    %v1017 = vunpack.c.l.b16 %v918
    %v1018 = vunpack.c.h.b16 %v918
    %v1019 = vunpack.c.l.b16 %v919
    %v1020 = vunpack.c.h.b16 %v919
    %v1021 = vunpack.c.l.b16 %v920
    %v1022 = vunpack.c.h.b16 %v920
    %v1023 = vunpack.c.l.b16 %v921
    %v1024 = vunpack.c.h.b16 %v921
    %v1025 = vunpack.c.l.b16 %v922
    %v1026 = vunpack.c.h.b16 %v922
    %v1027 = vunpack.c.l.b16 %v923
    %v1028 = vunpack.c.h.b16 %v923
    %v1029 = vunpack.c.l.b16 %v924
    %v1030 = vunpack.c.h.b16 %v924
    %v1031 = vunpack.c.l.b16 %v925
    %v1032 = vunpack.c.h.b16 %v925
    %v1033 = vunpack.c.l.b16 %v926
    %v1034 = vunpack.c.h.b16 %v926
    %v1035 = vunpack.c.l.b16 %v927
    %v1036 = vunpack.c.h.b16 %v927
    %v1037 = vunpack.c.l.b16 %v928
    %v1038 = vunpack.c.h.b16 %v928
    %v1039 = vunpack.c.l.b16 %v929
    %v1040 = vunpack.c.h.b16 %v929
    %v1041 = vunpack.c.l.b16 %v930
    %v1042 = vunpack.c.h.b16 %v930
    %v1043 = vunpack.c.l.b16 %v931
    %v1044 = vunpack.c.h.b16 %v931
    %v1045 = vunpack.c.l.b16 %v932
    %v1046 = vunpack.c.h.b16 %v932
    %v1047 = vunpack.c.l.b16 %v933
    %v1048 = vunpack.c.h.b16 %v933
    %v1049 = vunpack.c.l.b16 %v934
    %v1050 = vunpack.c.h.b16 %v934
    %v1051 = vunpack.c.l.b16 %v935
    %v1052 = vunpack.c.h.b16 %v935
    %v1053 = vunpack.c.l.b16 %v936
    %v1054 = vunpack.c.h.b16 %v936
    %v1055 = vunpack.c.l.b16 %v937
    %v1056 = vunpack.c.h.b16 %v937
    %v1057 = vunpack.c.l.b16 %v938
    %v1058 = vunpack.c.h.b16 %v938
    %v1059 = vunpack.c.l.b16 %v939
    %v1060 = vunpack.c.h.b16 %v939
    %v1061 = vunpack.c.l.b16 %v940
    %v1062 = vunpack.c.h.b16 %v940
    %v1063 = vunpack.c.l.b16 %v941
    %v1064 = vunpack.c.h.b16 %v941
    %v1065 = vunpack.c.l.b16 %v942
    %v1066 = vunpack.c.h.b16 %v942
    %v1067 = vunpack.c.l.b16 %v943
    %v1068 = vunpack.c.h.b16 %v943
    %v1069 = vunpack.c.l.b16 %v944
    %v1070 = vunpack.c.h.b16 %v944
    %v1071 = vunpack.c.l.b16 %v945
    %v1072 = vunpack.c.h.b16 %v945
    %v1073 = vunpack.c.l.b16 %v946
    %v1074 = vunpack.c.h.b16 %v946
    %v1075 = vunpack.c.l.b16 %v947
    %v1076 = vunpack.c.h.b16 %v947
    %v1077 = vunpack.c.l.b16 %v948
    %v1078 = vunpack.c.h.b16 %v948
    %v1079 = vunpack.c.l.b16 %v949
    %v1080 = vunpack.c.h.b16 %v949
    %v1081 = vunpack.c.l.b16 %v950
    %v1082 = vunpack.c.h.b16 %v950
    %v1083 = vunpack.c.l.b16 %v951
    %v1084 = vunpack.c.h.b16 %v951
    %v1085 = vunpack.c.l.b16 %v952
    %v1086 = vunpack.c.h.b16 %v952
    %v1087 = vunpack.c.l.b16 %v953
    %v1088 = vunpack.c.h.b16 %v953
    %v1089 = vunpack.c.l.b16 %v954
    %v1090 = vunpack.c.h.b16 %v954
    %v1091 = vunpack.c.l.b16 %v955
    %v1092 = vunpack.c.h.b16 %v955
    %v1093 = vunpack.c.l.b16 %v956
    %v1094 = vunpack.c.h.b16 %v956
    %v1095 = vunpack.c.l.b16 %v957
    %v1096 = vunpack.c.h.b16 %v957
    %v1097 = vunpack.c.l.b16 %v958
    %v1098 = vunpack.c.h.b16 %v958
    %v1099 = vunpack.c.l.b16 %v959
    %v1100 = vunpack.c.h.b16 %v959
    %v1101 = vunpack.c.l.b16 %v960
    %v1102 = vunpack.c.h.b16 %v960
    %v1103 = vunpack.c.l.b16 %v961
    %v1104 = vunpack.c.h.b16 %v961
    %v1105 = vunpack.c.l.b16 %v962
    %v1106 = vunpack.c.h.b16 %v962
    %v1107 = vpack.c.b16 %v1013, %v1011
    %v1108 = vpack.c.b16 %v1014, %v1012
    %v1109 = vpack.c.b16 %v1017, %v1015
    %v1110 = vpack.c.b16 %v1018, %v1016
    %v1111 = vpack.c.b16 %v1021, %v1019
    %v1112 = vpack.c.b16 %v1022, %v1020
    %v1113 = vpack.c.b16 %v1025, %v1023
    %v1114 = vpack.c.b16 %v1026, %v1024
    %v1115 = vpack.c.b16 %v1029, %v1027
    %v1116 = vpack.c.b16 %v1030, %v1028
    %v1117 = vpack.c.b16 %v1033, %v1031
    %v1118 = vpack.c.b16 %v1034, %v1032
    %v1119 = vpack.c.b16 %v1037, %v1035
    %v1120 = vpack.c.b16 %v1038, %v1036
    %v1121 = vpack.c.b16 %v1041, %v1039
    %v1122 = vpack.c.b16 %v1042, %v1040
    %v1123 = vpack.c.b16 %v1045, %v1043
    %v1124 = vpack.c.b16 %v1046, %v1044
    %v1125 = vpack.c.b16 %v1049, %v1047
    %v1126 = vpack.c.b16 %v1050, %v1048
    %v1127 = vpack.c.b16 %v1053, %v1051
    %v1128 = vpack.c.b16 %v1054, %v1052
    %v1129 = vpack.c.b16 %v1057, %v1055
    %v1130 = vpack.c.b16 %v1058, %v1056
    %v1131 = vpack.c.b16 %v1061, %v1059
    %v1132 = vpack.c.b16 %v1062, %v1060
    %v1133 = vpack.c.b16 %v1065, %v1063
    %v1134 = vpack.c.b16 %v1066, %v1064
    %v1135 = vpack.c.b16 %v1069, %v1067
    %v1136 = vpack.c.b16 %v1070, %v1068
    %v1137 = vpack.c.b16 %v1073, %v1071
    %v1138 = vpack.c.b16 %v1074, %v1072
    %v1139 = vpack.c.b16 %v1077, %v1075
    %v1140 = vpack.c.b16 %v1078, %v1076
    %v1141 = vpack.c.b16 %v1081, %v1079
    %v1142 = vpack.c.b16 %v1082, %v1080
    %v1143 = vpack.c.b16 %v1085, %v1083
    %v1144 = vpack.c.b16 %v1086, %v1084
    %v1145 = vpack.c.b16 %v1089, %v1087
    %v1146 = vpack.c.b16 %v1090, %v1088
    %v1147 = vpack.c.b16 %v1093, %v1091
    %v1148 = vpack.c.b16 %v1094, %v1092
    %v1149 = vpack.c.b16 %v1097, %v1095
    %v1150 = vpack.c.b16 %v1098, %v1096
    %v1151 = vpack.c.b16 %v1101, %v1099
    %v1152 = vpack.c.b16 %v1102, %v1100
    %v1153 = vpack.c.b16 %v1105, %v1103
    %v1154 = vpack.c.b16 %v1106, %v1104
    %1203 = vmatprep.subr.bf16.mxu0 %v1108
    %1204 = vmatpush1.bf16.msra.mxu0 %v1107
    %1205 = vmatprep.subr.bf16.mxu0 %v1110
    %1206 = vmatpush1.bf16.msra.mxu0 %v1109
    %1207 = vmatprep.subr.bf16.mxu0 %v1112
    %1208 = vmatpush1.bf16.msra.mxu0 %v1111
    %1209 = vmatprep.subr.bf16.mxu0 %v1114
    %1210 = vmatpush1.bf16.msra.mxu0 %v1113
    %1211 = vmatprep.subr.bf16.mxu0 %v1116
    %1212 = vmatpush1.bf16.msra.mxu0 %v1115
    %1213 = vmatprep.subr.bf16.mxu0 %v1118
    %1214 = vmatpush1.bf16.msra.mxu0 %v1117
    %1215 = vmatprep.subr.bf16.mxu0 %v1120
    %1216 = vmatpush1.bf16.msra.mxu0 %v1119
    %1217 = vmatprep.subr.bf16.mxu0 %v1122
    %1218 = vmatpush1.bf16.msra.mxu0 %v1121
    %1219 = vmatprep.subr.bf16.mxu0 %v1124
    %1220 = vmatpush1.bf16.msra.mxu0 %v1123
    %1221 = vmatprep.subr.bf16.mxu0 %v1126
    %1222 = vmatpush1.bf16.msra.mxu0 %v1125
    %1223 = vmatprep.subr.bf16.mxu0 %v1128
    %1224 = vmatpush1.bf16.msra.mxu0 %v1127
    %1225 = vmatprep.subr.bf16.mxu0 %v1130
    %1226 = vmatpush1.bf16.msra.mxu0 %v1129
    %1227 = vmatprep.subr.bf16.mxu0 %v1132
    %1228 = vmatpush1.bf16.msra.mxu0 %v1131
    %1229 = vmatprep.subr.bf16.mxu0 %v1134
    %1230 = vmatpush1.bf16.msra.mxu0 %v1133
    %1231 = vmatprep.subr.bf16.mxu0 %v1136
    %1232 = vmatpush1.bf16.msra.mxu0 %v1135
    %1233 = vmatprep.subr.bf16.mxu0 %v1138
    %1234 = vmatpush1.bf16.msra.mxu0 %v1137
    %1235 = vmatprep.mubr.bf16.mxu0 %v913
    %1236 = vmatmul.mubr.bf16.gmra.mrb[0].mxu0 %v912
    %v1237 = vpop.f32.mrb[0].mxu0
    %v1238 = vadd.f32 0.0, %v1237
    %v1239 = vpop.f32.mrb[0].mxu0
    %v1240 = vadd.f32 0.0, %v1239
    %v1241 = vpop.f32.mrb[0].mxu0
    %v1242 = vadd.f32 0.0, %v1241
    %v1243 = vpop.f32.mrb[0].mxu0
    %v1244 = vadd.f32 0.0, %v1243
    %1245 = vdwg.mxu0
    %1246 = vmatprep.subr.bf16.mxu0 %v1140
    %1247 = vmatpush1.bf16.msra.mxu0 %v1139
    %1248 = vmatprep.subr.bf16.mxu0 %v1142
    %1249 = vmatpush1.bf16.msra.mxu0 %v1141
    %1250 = vmatprep.subr.bf16.mxu0 %v1144
    %1251 = vmatpush1.bf16.msra.mxu0 %v1143
    %1252 = vmatprep.subr.bf16.mxu0 %v1146
    %1253 = vmatpush1.bf16.msra.mxu0 %v1145
    %1254 = vmatprep.subr.bf16.mxu0 %v1148
    %1255 = vmatpush1.bf16.msra.mxu0 %v1147
    %1256 = vmatprep.subr.bf16.mxu0 %v1150
    %1257 = vmatpush1.bf16.msra.mxu0 %v1149
    %1258 = vmatprep.subr.bf16.mxu0 %v1152
    %1259 = vmatpush1.bf16.msra.mxu0 %v1151
    %1260 = vmatprep.subr.bf16.mxu0 %v1154
    %1261 = vmatpush1.bf16.msra.mxu0 %v1153
    %1262 = vmatprep.subr.bf16.mxu0 0
    %1263 = vmatpush1.bf16.msra.mxu0 0
    %1264 = vmatprep.subr.bf16.mxu0 0
    %1265 = vmatpush1.bf16.msra.mxu0 0
    %1266 = vmatprep.subr.bf16.mxu0 0
    %1267 = vmatpush1.bf16.msra.mxu0 0
    %1268 = vmatprep.subr.bf16.mxu0 0
    %1269 = vmatpush1.bf16.msra.mxu0 0
    %1270 = vmatprep.subr.bf16.mxu0 0
    %1271 = vmatpush1.bf16.msra.mxu0 0
    %1272 = vmatprep.subr.bf16.mxu0 0
    %1273 = vmatpush1.bf16.msra.mxu0 0
    %1274 = vmatprep.subr.bf16.mxu0 0
    %1275 = vmatpush1.bf16.msra.mxu0 0
    %1276 = vmatprep.subr.bf16.mxu0 0
    %1277 = vmatpush1.bf16.msra.mxu0 0
    %1278 = vmatprep.mubr.bf16.mxu0 0
    %1279 = vmatmul.mubr.bf16.gmra.mrb[0].mxu0 %v914
    %v1280 = vpop.f32.mrb[0].mxu0
    %v1281 = vadd.f32 %v1238, %v1280
    %v1282 = vpop.f32.mrb[0].mxu0
    %v1283 = vadd.f32 %v1240, %v1282
    %v1284 = vpop.f32.mrb[0].mxu0
    %v1285 = vadd.f32 %v1242, %v1284
    %v1286 = vpop.f32.mrb[0].mxu0
    %v1287 = vadd.f32 %v1244, %v1286
    %1288 = vdwg.mxu0
    %v1289 = vsub.f32 %v1281, %v52
    %v1290 = vsub.f32 %v1283, %v53
    %v1291 = vsub.f32 %v1285, %v54
    %v1292 = vsub.f32 %v1287, %v55
    %v1293 = vmul.f32 %v1289, %v1289
    %v1294 = vmul.f32 %v1290, %v1290
    %v1295 = vmul.f32 %v1291, %v1291
    %v1296 = vmul.f32 %v1292, %v1292
    %v1297 = vadd.f32 %v1293, %v1295
    %v1298 = vrot.slane %v1297, 4
    %v1299 = vadd.f32 %v1297, %v1298
    %v1300 = vrot.slane %v1299, 2
    %v1301 = vadd.f32 %v1299, %v1300
    %v1302 = vrot.slane %v1301, 1
    %v1303 = vadd.f32 %v1301, %v1302
    %v1304 = vadd.f32 %v1294, %v1296
    %v1305 = vrot.slane %v1304, 4
    %v1306 = vadd.f32 %v1304, %v1305
    %v1307 = vrot.slane %v1306, 2
    %v1308 = vadd.f32 %v1306, %v1307
    %v1309 = vrot.slane %v1308, 1
    %v1310 = vadd.f32 %v1308, %v1309
    %v1313 = vcombine.low %v1303, %v1310
    %v1315 = vunpack.c.l.s4 1966171168
    %v1316 = vunpack.c.0.s8 %v1315
    %v1317 = vlaneseq
    %v1318 = vshrl.u32 %v1317, 7
    %v1319 = vsub.s32 %v1316, %v1318
    %v1320 = vrot.slane %v1313, %v1319
    %v1322 = vunpack.c.l.s4 1966171168
    %v1323 = vunpack.c.0.s8 %v1322
    %v1324 = vlaneseq
    %v1325 = vshrl.u32 %v1324, 7
    %v1326 = vsub.s32 %v1323, %v1325
    %v1327 = vrot.slane %v1320, %v1326
    %v1329 = vlaneseq
    %vm1330 = vcmp.ge.s32.totalorder %v1329, 0
    %vm1331 = vcmp.lt.s32.totalorder %v1329, 256
    %vm1332 = vmand %vm1330, %vm1331
    %1333 = vst.msk [vmem:[#allocation7] sm:$0x3] %vm1332, %v1327
    // Predicated region
    $region30: #{tpu_custom_call.1} parent=1 // pred_check
      _
    $region31: #{tpu_custom_call.1} parent=1 // pred_check_branch
      %1335 = sbr.rel (0) target = $region33
    $region32: #{tpu_custom_call.1} parent=1 // pred_region
      %s1337 = ssub.s32 32, 32
      %1338 = vsyncadd [#allocation4], %s1337
      %s1340 = sshll.u32 [#allocation7], 4
      %s1341 = int_to_ptr.vmem [resolvable:$true] %s1340
      %1343 = dma.vmem_to_hbm [thread:$0]  %s1341, 32, %s5, [#allocation4]
    $region33: #{tpu_custom_call.1} parent=1 // pred_fallthru
      _
    // Predicated region
    $region34: #{tpu_custom_call.1} parent=1 // pred_check
      _
    $region35: #{tpu_custom_call.1} parent=1 // pred_check_branch
      %1345 = sbr.rel (0) target = $region37
    $region36: #{tpu_custom_call.1} parent=1 // pred_region
      %1346 = dma.done [#allocation4], 32
    $region37: #{tpu_custom_call.1} parent=1 // pred_fallthru
      _
    %1347 = vsyncpa [#allocation3], 1
    %1348 = vsyncpa [#allocation6], 1
    %1349 = vsyncpa [#allocation4], 1

</llo_original>
